<compile_context>
chip_gen: v7x
topology: tpu7x:2x2x1
jax: 0.10.0
libtpu: 0.0.40
codegen_flags: <defaults>
</compile_context>

<pallas_src>
import functools

import jax
import jax.numpy as jnp
from jax import lax
from jax.experimental import pallas as pl
from jax.experimental.pallas import tpu as pltpu

LANE = 128          # lane width (last-dim alignment)
BF16_SUBLANE = 16   # native bf16 sublane packing (second-to-last dim of bf16 blocks)


def _round_up(n, m):
    return (n + m - 1) // m * m


def _vmem_budget():
    """Generation-aware scoped-VMEM budget: ~0.75x physical capacity
    (~48 MiB on v7x, ~96 MiB on v5e/v6e); conservative v7x fallback."""
    try:
        cap = pltpu.get_tpu_info().vmem_capacity_bytes
    except Exception:
        cap = 64 * 1024 * 1024
    return int(cap * 3 // 4)


def _choose_tile_f(F, D, Hd, tile_b, budget):
    """Largest lane-aligned F tile whose double-buffered working set fits `budget`.
    Returns (tile_f, single_pass).  tile_f (nearly) divides F so no zero-padded wc
    bytes are streamed and no near-empty trailing grid step runs."""
    fixed = (tile_b * D * 4            # f32 accumulator scratch
             + 2 * D * Hd * 2          # w1 (bf16, double-buffered)
             + 2 * tile_b * LANE * 4   # output slab (double-buffered)
             + (D + 2 * Hd + 1) * 4)   # bc / b1 / w2^T / b2
    per_f = 2 * 2 * (D + tile_b)       # double-buffered bf16 wc row + x column
    tile_f_max = max(LANE, min(8192, (budget - fixed) // per_f))
    tile_f_max = (tile_f_max // LANE) * LANE
    if tile_f_max >= F:
        return F, True                 # whole reduction fits VMEM: collapse F axis
    n_tiles = -(-F // tile_f_max)
    tile_f = _round_up(-(-F // n_tiles), LANE)
    return tile_f, False


def _scorer_finalize(emb, w1_ref, b1_ref, w2t_ref, b2_ref, o_ref):
    """Shared finalize: L2 normalize -> Linear(D->H) -> ReLU -> Linear(H->1)."""
    # embeddings / embeddings.norm(dim=-1, keepdim=True); rsqrt rides the EUP slot.
    # No epsilon (matches PyTorch: an all-zero row would give NaN there too).
    inv_norm = lax.rsqrt(jnp.sum(emb * emb, axis=-1, keepdims=True))
    emb = emb * inv_norm
    # Linear(D->H) at bf16 MXU rate, f32 accumulation; bias/ReLU stay in f32.
    h = jnp.dot(emb.astype(jnp.bfloat16), w1_ref[...],
                preferred_element_type=jnp.float32)
    h = jnp.maximum(h + b1_ref[...], 0.0)
    # Degenerate N=1 projection off the MXU: VPU multiply + lane reduce; b2 from SMEM.
    score = jnp.sum(h * w2t_ref[...], axis=-1, keepdims=True) + b2_ref[0]
    # Lane-dense store (unmasked vst): broadcast score across the 128-lane slab.
    o_ref[...] = jnp.broadcast_to(score, o_ref.shape).astype(o_ref.dtype)


def fused_kernel(x_ref, wc_ref, bc_ref, w1_ref, b1_ref, w2t_ref, b2_ref, o_ref):
    """Single-pass kernel: whole F reduction resident in VMEM. No accumulator
    scratch, no pl.when branching — one matmul + finalize per batch tile."""
    emb = jnp.dot(x_ref[...], wc_ref[...], preferred_element_type=jnp.float32)
    emb = emb + bc_ref[...]
    _scorer_finalize(emb, w1_ref, b1_ref, w2t_ref, b2_ref, o_ref)


def accum_kernel(x_ref, wc_ref, bc_ref, w1_ref, b1_ref, w2t_ref, b2_ref,
                 o_ref, acc_ref):
    """Multi-F-tile kernel: (tile_b, D) f32 accumulator resident across the
    'arbitrary' F axis; clip bias folded into the k == 0 init."""
    k = pl.program_id(1)

    @pl.when(k == 0)
    def _init():
        acc_ref[...] = jnp.broadcast_to(bc_ref[...], acc_ref.shape)

    acc_ref[...] += jnp.dot(x_ref[...], wc_ref[...],
                            preferred_element_type=jnp.float32)

    @pl.when(k == pl.num_programs(1) - 1)
    def _finalize():
        _scorer_finalize(acc_ref[...], w1_ref, b1_ref, w2t_ref, b2_ref, o_ref)


def combined_model(image, params, *, tile_b=None, tile_f=None):
    """image: [B, C, H, W] float32 (NCHW, CLIPProcessor pixel_values-like).
    Returns score [B, 1] float32."""
    wc, bc, w1, b1, w2, b2 = params
    B = image.shape[0]
    x = image.reshape(B, -1)                  # flatten NCHW -> [B, F]
    F = x.shape[1]
    D = wc.shape[1]
    Hd = w1.shape[1]
    assert D % LANE == 0 and Hd % LANE == 0, "embed/hidden dims must be lane-aligned"

    # One batch tile covering the whole (padded) batch so wc is streamed from HBM
    # exactly once; capped at 256 rows to stay inside the VMEM budget for huge B.
    if tile_b is None:
        tile_b = min(_round_up(B, BF16_SUBLANE), 256)
    tile_b = _round_up(tile_b, BF16_SUBLANE)
    B_pad = _round_up(max(B, tile_b), tile_b)

    budget = _vmem_budget()
    if tile_f is None:
        tile_f, single_pass = _choose_tile_f(F, D, Hd, tile_b, budget)
    else:
        single_pass = tile_f >= F
        tile_f = F if single_pass else _round_up(tile_f, LANE)
    F_pad = F if single_pass else _round_up(F, tile_f)

    # bf16 MXU operands (halves HBM traffic on the dominant stream); cast BEFORE
    # padding and skip padding copies when shapes already line up.  In production
    # wc would be pre-cast/pre-padded once outside the per-call path — under jit
    # this is a cheap fused prologue on constant weights.
    wc_bf = wc.astype(jnp.bfloat16)
    if F_pad != F:
        wc_bf = jnp.zeros((F_pad, D), jnp.bfloat16).at[:F, :].set(wc_bf)
    x_bf = x.astype(jnp.bfloat16)
    if B_pad != B or F_pad != F:
        x_bf = jnp.zeros((B_pad, F_pad), jnp.bfloat16).at[:B, :F].set(x_bf)

    w1_bf = w1.astype(jnp.bfloat16)                  # finalize matmul at bf16 MXU rate
    bc_f = bc.reshape(1, D).astype(jnp.float32)
    b1_f = b1.reshape(1, Hd).astype(jnp.float32)
    w2t = w2.reshape(1, Hd).astype(jnp.float32)      # transposed -> lane reduction
    b2_s = b2.reshape(1).astype(jnp.float32)         # scalar, lives in SMEM

    flops = 2 * B_pad * F_pad * D + 2 * B_pad * D * Hd + 2 * B_pad * Hd
    bytes_accessed = (x_bf.size * 2 + wc_bf.size * 2 + w1_bf.size * 2
                      + (bc_f.size + b1_f.size + w2t.size + b2_s.size) * 4
                      + B_pad * LANE * 4)
    cost = pl.CostEstimate(flops=flops, transcendentals=B_pad,
                           bytes_accessed=bytes_accessed)

    if single_pass:
        grid = (B_pad // tile_b,)
        in_specs = [
            pl.BlockSpec((tile_b, F_pad), lambda b: (b, 0)),        # x
            pl.BlockSpec((F_pad, D), lambda b: (0, 0)),             # wc (VMEM-resident)
            pl.BlockSpec((1, D), lambda b: (0, 0)),                 # bc
            pl.BlockSpec((D, Hd), lambda b: (0, 0)),                # w1 (bf16)
            pl.BlockSpec((1, Hd), lambda b: (0, 0)),                # b1
            pl.BlockSpec((1, Hd), lambda b: (0, 0)),                # w2^T
            pl.BlockSpec(memory_space=pltpu.MemorySpace.SMEM),      # b2 scalar
        ]
        out_specs = pl.BlockSpec((tile_b, LANE), lambda b: (b, 0))
        scratch_shapes = []
        kernel = fused_kernel
        # Constant wc index_map + serial batch axis => wc fetched once, kept resident.
        dims = ("arbitrary",)
    else:
        grid = (B_pad // tile_b, F_pad // tile_f)
        in_specs = [
            pl.BlockSpec((tile_b, tile_f), lambda b, k: (b, k)),    # x
            pl.BlockSpec((tile_f, D), lambda b, k: (k, 0)),         # wc
            pl.BlockSpec((1, D), lambda b, k: (0, 0)),              # bc
            pl.BlockSpec((D, Hd), lambda b, k: (0, 0)),             # w1 (bf16)
            pl.BlockSpec((1, Hd), lambda b, k: (0, 0)),             # b1
            pl.BlockSpec((1, Hd), lambda b, k: (0, 0)),             # w2^T
            pl.BlockSpec(memory_space=pltpu.MemorySpace.SMEM),      # b2 scalar
        ]
        out_specs = pl.BlockSpec((tile_b, LANE), lambda b, k: (b, 0))
        scratch_shapes = [pltpu.VMEM((tile_b, D), jnp.float32)]
        kernel = accum_kernel
        # F is the reduction axis.  Batch stays "arbitrary": batch-sharding an
        # HBM-bound kernel across v7x's two TCs would double total wc bytes for
        # ~0 gain (one TC already drives full HBM bandwidth).
        dims = ("arbitrary", "arbitrary")

    out = pl.pallas_call(
        kernel,
        out_shape=jax.ShapeDtypeStruct((B_pad, LANE), jnp.float32),
        grid_spec=pltpu.PrefetchScalarGridSpec(
            num_scalar_prefetch=0,
            grid=grid,
            in_specs=in_specs,
            out_specs=out_specs,
            scratch_shapes=scratch_shapes,
        ),
        compiler_params=pltpu.CompilerParams(
            dimension_semantics=dims,
            vmem_limit_bytes=budget,
        ),
        cost_estimate=cost,
    )(x_bf, wc_bf, bc_f, w1_bf, b1_f, w2t, b2_s)

    return out[:B, :1]    # drop batch padding + lane-broadcast columns


def init_params(key, feat_dim, embed_dim, hidden_dim):
    ks = jax.random.split(key, 6)
    wc = jax.random.normal(ks[0], (feat_dim, embed_dim), jnp.float32) * 0.02
    bc = jax.random.normal(ks[1], (1, embed_dim), jnp.float32) * 0.01
    w1 = jax.random.normal(ks[2], (embed_dim, hidden_dim), jnp.float32) * 0.05
    b1 = jax.random.normal(ks[3], (1, hidden_dim), jnp.float32) * 0.01
    w2 = jax.random.normal(ks[4], (hidden_dim, 1), jnp.float32) * 0.05
    b2 = jax.random.normal(ks[5], (1, 1), jnp.float32) * 0.01
    return wc, bc, w1, b1, w2, b2


def reference(image, params):
    """Plain-JAX reference mirroring the kernel's bf16 casts of the MXU operands."""
    wc, bc, w1, b1, w2, b2 = params
    x = image.reshape(image.shape[0], -1)
    xb = x.astype(jnp.bfloat16).astype(jnp.float32)
    wcb = wc.astype(jnp.bfloat16).astype(jnp.float32)
    emb = xb @ wcb + bc
    emb = emb / jnp.linalg.norm(emb, axis=-1, keepdims=True)
    embb = emb.astype(jnp.bfloat16).astype(jnp.float32)
    w1b = w1.astype(jnp.bfloat16).astype(jnp.float32)
    h = jnp.maximum(embb @ w1b + b1, 0.0)
    return h @ w2 + b2


if __name__ == "__main__":
    key = jax.random.PRNGKey(0)
    k_img, k_par = jax.random.split(key)

    # Small but lane/sublane-friendly shapes: B multiple of 16, D/H multiples of 128.
    B, C, HI, WI = 16, 3, 16, 16        # pixel_values-like NCHW input; F = 768
    EMBED_DIM = 128                     # synthetic CLIP embedding size (lane-aligned)
    HIDDEN_DIM = 128                    # synthetic scorer hidden size (lane-aligned)

    image = jax.random.normal(k_img, (B, C, HI, WI), jnp.float32)
    params = init_params(k_par, C * HI * WI, EMBED_DIM, HIDDEN_DIM)

    ref = reference(image, params)

    # Default path: single batch tile + collapsed F axis (whole reduction in VMEM).
    fused = jax.jit(combined_model)
    score = jax.block_until_ready(fused(image, params))
    assert score.shape == (B, 1), score.shape
    assert jnp.allclose(score, ref, atol=2e-3, rtol=2e-2), (
        "fused path max abs err = %g" % float(jnp.max(jnp.abs(score - ref))))

    # Forced multi-F-tile path (exercises the accumulator kernel): 3 F-tiles of 256.
    tiled = jax.jit(functools.partial(combined_model, tile_f=256))
    score_t = jax.block_until_ready(tiled(image, params))
    assert score_t.shape == (B, 1), score_t.shape
    assert jnp.allclose(score_t, ref, atol=2e-3, rtol=2e-2), (
        "tiled path max abs err = %g" % float(jnp.max(jnp.abs(score_t - ref))))

    # TODO(synk): the CLIP ViT-L/14 vision tower (patch conv + transformer blocks)
    # and CLIPProcessor preprocessing are stood in by a single linear projection;
    # no pretrained checkpoint is loaded per task constraints.
    print("KERNEL_OK")
</pallas_src>

<mosaic_0001>
module attributes {stable_mosaic.version = 11 : i64} {
  func.func @fused_kernel(%arg0: i32, %arg1: memref<16x768xbf16, #tpu.memory_space<vmem>>, %arg2: memref<768x128xbf16, #tpu.memory_space<vmem>>, %arg3: memref<1x128xf32, #tpu.memory_space<vmem>>, %arg4: memref<128x128xbf16, #tpu.memory_space<vmem>>, %arg5: memref<1x128xf32, #tpu.memory_space<vmem>>, %arg6: memref<1x128xf32, #tpu.memory_space<vmem>>, %arg7: memref<1xf32, #tpu.memory_space<smem>>, %arg8: memref<16x128xf32, #tpu.memory_space<vmem>>) attributes {dimension_semantics = [#tpu.dimension_semantics<arbitrary>], iteration_bounds = array<i64: 1>, scalar_prefetch = 0 : i64, scratch_operands = 0 : i64, tpu.core_type = #tpu.core_type<tc>, window_params = [{transform_indices = @transform_0, window_bounds = array<i64: 16, 768>}, {pipeline_mode = #tpu.pipeline_mode<synchronous>, transform_indices = @transform_1, window_bounds = array<i64: 768, 128>}, {pipeline_mode = #tpu.pipeline_mode<synchronous>, transform_indices = @transform_2, window_bounds = array<i64: 1, 128>}, {pipeline_mode = #tpu.pipeline_mode<synchronous>, transform_indices = @transform_3, window_bounds = array<i64: 128, 128>}, {pipeline_mode = #tpu.pipeline_mode<synchronous>, transform_indices = @transform_4, window_bounds = array<i64: 1, 128>}, {pipeline_mode = #tpu.pipeline_mode<synchronous>, transform_indices = @transform_5, window_bounds = array<i64: 1, 128>}, {transform_indices = @transform_6, window_bounds = array<i64: 1>}, {transform_indices = @transform_7, window_bounds = array<i64: 16, 128>}]} {
    %c0 = arith.constant 0 : index
    %c0_0 = arith.constant 0 : index
    %0 = vector.load %arg1[%c0, %c0_0] : memref<16x768xbf16, #tpu.memory_space<vmem>>, vector<16x768xbf16>
    %c0_1 = arith.constant 0 : index
    %c0_2 = arith.constant 0 : index
    %1 = vector.load %arg2[%c0_1, %c0_2] : memref<768x128xbf16, #tpu.memory_space<vmem>>, vector<768x128xbf16>
    %cst = arith.constant dense<0.000000e+00> : vector<16x128xf32>
    %2 = tpu.matmul %0, %1, %cst {dimension_numbers = #tpu.dot_dimension_numbers<[1], [0], [0], [1], [0, 0, 1, 1], [], []>} : vector<16x768xbf16>, vector<768x128xbf16>, vector<16x128xf32> -> vector<16x128xf32>
    %c0_3 = arith.constant 0 : index
    %c0_4 = arith.constant 0 : index
    %3 = vector.load %arg3[%c0_3, %c0_4] : memref<1x128xf32, #tpu.memory_space<vmem>>, vector<1x128xf32>
    %4 = vector.broadcast %3 : vector<1x128xf32> to vector<16x128xf32>
    %5 = arith.addf %2, %4 : vector<16x128xf32>
    %6 = arith.mulf %5, %5 : vector<16x128xf32>
    %cst_5 = arith.constant dense<0.000000e+00> : vector<16xf32>
    %7 = vector.multi_reduction <add>, %6, %cst_5 [1] : vector<16x128xf32> to vector<16xf32>
    %8 = vector.shape_cast %7 : vector<16xf32> to vector<16x1xf32>
    %9 = math.rsqrt %8 : vector<16x1xf32>
    %10 = vector.broadcast %9 : vector<16x1xf32> to vector<16x128xf32>
    %11 = arith.mulf %5, %10 : vector<16x128xf32>
    %12 = arith.truncf %11 : vector<16x128xf32> to vector<16x128xbf16>
    %c0_6 = arith.constant 0 : index
    %c0_7 = arith.constant 0 : index
    %13 = vector.load %arg4[%c0_6, %c0_7] : memref<128x128xbf16, #tpu.memory_space<vmem>>, vector<128x128xbf16>
    %cst_8 = arith.constant dense<0.000000e+00> : vector<16x128xf32>
    %14 = tpu.matmul %12, %13, %cst_8 {dimension_numbers = #tpu.dot_dimension_numbers<[1], [0], [0], [1], [0, 0, 1, 1], [], []>} : vector<16x128xbf16>, vector<128x128xbf16>, vector<16x128xf32> -> vector<16x128xf32>
    %c0_9 = arith.constant 0 : index
    %c0_10 = arith.constant 0 : index
    %15 = vector.load %arg5[%c0_9, %c0_10] : memref<1x128xf32, #tpu.memory_space<vmem>>, vector<1x128xf32>
    %16 = vector.broadcast %15 : vector<1x128xf32> to vector<16x128xf32>
    %17 = arith.addf %14, %16 : vector<16x128xf32>
    %cst_11 = arith.constant 0.000000e+00 : f32
    %18 = vector.broadcast %cst_11 : f32 to vector<16x128xf32>
    %19 = arith.maximumf %17, %18 : vector<16x128xf32>
    %c0_12 = arith.constant 0 : index
    %c0_13 = arith.constant 0 : index
    %20 = vector.load %arg6[%c0_12, %c0_13] : memref<1x128xf32, #tpu.memory_space<vmem>>, vector<1x128xf32>
    %21 = vector.broadcast %20 : vector<1x128xf32> to vector<16x128xf32>
    %22 = arith.mulf %19, %21 : vector<16x128xf32>
    %cst_14 = arith.constant dense<0.000000e+00> : vector<16xf32>
    %23 = vector.multi_reduction <add>, %22, %cst_14 [1] : vector<16x128xf32> to vector<16xf32>
    %24 = vector.shape_cast %23 : vector<16xf32> to vector<16x1xf32>
    %c0_15 = arith.constant 0 : index
    %25 = memref.load %arg7[%c0_15] : memref<1xf32, #tpu.memory_space<smem>>
    %26 = vector.broadcast %25 : f32 to vector<16x1xf32>
    %27 = arith.addf %24, %26 : vector<16x1xf32>
    %28 = vector.shape_cast %27 : vector<16x1xf32> to vector<16x1xf32>
    %29 = vector.broadcast %28 : vector<16x1xf32> to vector<16x128xf32>
    %c0_16 = arith.constant 0 : index
    %c0_17 = arith.constant 0 : index
    %30 = vector.load %arg8[%c0_16, %c0_17] : memref<16x128xf32, #tpu.memory_space<vmem>>, vector<16x128xf32>
    tpu.vector_store %arg8[%c0_16, %c0_17], %29 {strides = array<i32>} : memref<16x128xf32, #tpu.memory_space<vmem>>, vector<16x128xf32>,
    return
  }
  func.func @transform_0(%arg0: i32) -> (i32, i32) {
    %c0_i32 = arith.constant 0 : i32
    %c0_i32_0 = arith.constant 0 : i32
    return %arg0, %c0_i32 : i32, i32
  }
  func.func @transform_1(%arg0: i32) -> (i32, i32) {
    %c0_i32 = arith.constant 0 : i32
    %c0_i32_0 = arith.constant 0 : i32
    %c0_i32_1 = arith.constant 0 : i32
    return %c0_i32, %c0_i32_0 : i32, i32
  }
  func.func @transform_2(%arg0: i32) -> (i32, i32) {
    %c0_i32 = arith.constant 0 : i32
    %c0_i32_0 = arith.constant 0 : i32
    %c0_i32_1 = arith.constant 0 : i32
    return %c0_i32, %c0_i32_0 : i32, i32
  }
  func.func @transform_3(%arg0: i32) -> (i32, i32) {
    %c0_i32 = arith.constant 0 : i32
    %c0_i32_0 = arith.constant 0 : i32
    %c0_i32_1 = arith.constant 0 : i32
    return %c0_i32, %c0_i32_0 : i32, i32
  }
  func.func @transform_4(%arg0: i32) -> (i32, i32) {
    %c0_i32 = arith.constant 0 : i32
    %c0_i32_0 = arith.constant 0 : i32
    %c0_i32_1 = arith.constant 0 : i32
    return %c0_i32, %c0_i32_0 : i32, i32
  }
  func.func @transform_5(%arg0: i32) -> (i32, i32) {
    %c0_i32 = arith.constant 0 : i32
    %c0_i32_0 = arith.constant 0 : i32
    %c0_i32_1 = arith.constant 0 : i32
    return %c0_i32, %c0_i32_0 : i32, i32
  }
  func.func @transform_6(%arg0: i32) -> i32 {
    %c0_i32 = arith.constant 0 : i32
    %c0_i32_0 = arith.constant 0 : i32
    return %c0_i32 : i32
  }
  func.func @transform_7(%arg0: i32) -> (i32, i32) {
    %c0_i32 = arith.constant 0 : i32
    %c0_i32_0 = arith.constant 0 : i32
    return %arg0, %c0_i32 : i32, i32
  }
}

</mosaic_0001>

<llo_original>
// kernel: combined_model.1
$region0: #{combined_model.1}
  #allocation0 [shape = 'u32[]', space=smem, size = 0x4, offset = 0x4, fixed_abs, tag = 'smem constant byte address 0x4 - core index']
  #allocation1 [shape = 'u32[144,128]{1,0:T(1,128)}', space=vmem, size = 0x12000, scoped, tag = 'internal scratch']
  #allocation2 [shape = 'f32[1]{0:T(128)S(6)}', space=smem, size = 0x200, scoped, tag = 'scoped memory for combined_model.1']
  %s0 = inlined_call_operand.vmem [shape: bf16[16,768], index: 0, kind: input, shape index: {}]
  %s1 = inlined_call_operand.vmem [shape: bf16[768,128], index: 1, kind: input, shape index: {}]
  %s2 = inlined_call_operand.vmem [shape: f32[1,128], index: 2, kind: input, shape index: {}]
  %s3 = inlined_call_operand.vmem [shape: bf16[128,128], index: 3, kind: input, shape index: {}]
  %s4 = inlined_call_operand.vmem [shape: f32[1,128], index: 4, kind: input, shape index: {}]
  %s5 = inlined_call_operand.vmem [shape: f32[1,128], index: 5, kind: input, shape index: {}]
  %s6 = inlined_call_operand.<no memory space> [shape: f32[1], index: 6, kind: input, shape index: {}]
  %s7 = inlined_call_operand.vmem [shape: f32[16,128], index: 7, kind: output, shape index: {}]
  %s8 = sld [smem:[#allocation0]]
  $region38: #{combined_model.1} parent=0
    _
  %s10 = ssub.s32 1, %s8
  %s11 = scalar_select 0, %s10, %s8
  %12 = sst [smem:[#allocation2]] %s6
  // Predicated region
  $region2: #{combined_model.1} parent=0 // pred_check
    _
  $region3: #{combined_model.1} parent=0 // pred_check_branch
    %14 = sbr.rel (0) target = $region5
  $region4: #{combined_model.1} parent=0 // pred_region
    _
  $region5: #{combined_model.1} parent=0 // pred_fallthru
    _
  // Predicated region
  $region6: #{combined_model.1} parent=0 // pred_check
    _
  $region7: #{combined_model.1} parent=0 // pred_check_branch
    %16 = sbr.rel (0) target = $region9
  $region8: #{combined_model.1} parent=0 // pred_region
    _
  $region9: #{combined_model.1} parent=0 // pred_fallthru
    _
  // Predicated region
  $region10: #{combined_model.1} parent=0 // pred_check
    _
  $region11: #{combined_model.1} parent=0 // pred_check_branch
    %18 = sbr.rel (0) target = $region13
  $region12: #{combined_model.1} parent=0 // pred_region
    _
  $region13: #{combined_model.1} parent=0 // pred_fallthru
    _
  // Predicated region
  $region14: #{combined_model.1} parent=0 // pred_check
    _
  $region15: #{combined_model.1} parent=0 // pred_check_branch
    %20 = sbr.rel (0) target = $region17
  $region16: #{combined_model.1} parent=0 // pred_region
    _
  $region17: #{combined_model.1} parent=0 // pred_fallthru
    _
  // Predicated region
  $region18: #{combined_model.1} parent=0 // pred_check
    _
  $region19: #{combined_model.1} parent=0 // pred_check_branch
    %22 = sbr.rel (0) target = $region21
  $region20: #{combined_model.1} parent=0 // pred_region
    _
  $region21: #{combined_model.1} parent=0 // pred_fallthru
    _
  // Predicated region
  $region22: #{combined_model.1} parent=0 // pred_check
    _
  $region23: #{combined_model.1} parent=0 // pred_check_branch
    %24 = sbr.rel (0) target = $region25
  $region24: #{combined_model.1} parent=0 // pred_region
    _
  $region25: #{combined_model.1} parent=0 // pred_fallthru
    _
  // Predicated region
  $region26: #{combined_model.1} parent=0 // pred_check
    _
  $region27: #{combined_model.1} parent=0 // pred_check_branch
    %26 = sbr.rel (0) target = $region29
  $region28: #{combined_model.1} parent=0 // pred_region
    _
  $region29: #{combined_model.1} parent=0 // pred_fallthru
    _
  %v28 = vld [vmem:[%s0] sm:$0xff]
  %v29 = vld [vmem:[%s0 + $0x8] sm:$0xff]
  %v30 = vld [vmem:[%s0 + $0x10] sm:$0xff]
  %v31 = vld [vmem:[%s0 + $0x18] sm:$0xff]
  %v32 = vld [vmem:[%s0 + $0x20] sm:$0xff]
  %v33 = vld [vmem:[%s0 + $0x28] sm:$0xff]
  %v34 = vld [vmem:[%s1] sm:$0xf]
  %v35 = vld [vmem:[%s1 + $0x4] sm:$0xf]
  %v36 = vld [vmem:[%s1 + $0x8] sm:$0xf]
  %v37 = vld [vmem:[%s1 + $0xc] sm:$0xf]
  %v38 = vld [vmem:[%s1 + $0x10] sm:$0xf]
  %v39 = vld [vmem:[%s1 + $0x14] sm:$0xf]
  %v40 = vld [vmem:[%s1 + $0x18] sm:$0xf]
  %v41 = vld [vmem:[%s1 + $0x1c] sm:$0xf]
  %v42 = vld [vmem:[%s1 + $0x20] sm:$0xf]
  %v43 = vld [vmem:[%s1 + $0x24] sm:$0xf]
  %v44 = vld [vmem:[%s1 + $0x28] sm:$0xf]
  %v45 = vld [vmem:[%s1 + $0x2c] sm:$0xf]
  %v46 = vld [vmem:[%s1 + $0x30] sm:$0xf]
  %v47 = vld [vmem:[%s1 + $0x34] sm:$0xf]
  %v48 = vld [vmem:[%s1 + $0x38] sm:$0xf]
  %v49 = vld [vmem:[%s1 + $0x3c] sm:$0xf]
  %v50 = vld [vmem:[%s1 + $0x40] sm:$0xf]
  %v51 = vld [vmem:[%s1 + $0x44] sm:$0xf]
  %v52 = vld [vmem:[%s1 + $0x48] sm:$0xf]
  %v53 = vld [vmem:[%s1 + $0x4c] sm:$0xf]
  %v54 = vld [vmem:[%s1 + $0x50] sm:$0xf]
  %v55 = vld [vmem:[%s1 + $0x54] sm:$0xf]
  %v56 = vld [vmem:[%s1 + $0x58] sm:$0xf]
  %v57 = vld [vmem:[%s1 + $0x5c] sm:$0xf]
  %v58 = vld [vmem:[%s1 + $0x60] sm:$0xf]
  %v59 = vld [vmem:[%s1 + $0x64] sm:$0xf]
  %v60 = vld [vmem:[%s1 + $0x68] sm:$0xf]
  %v61 = vld [vmem:[%s1 + $0x6c] sm:$0xf]
  %v62 = vld [vmem:[%s1 + $0x70] sm:$0xf]
  %v63 = vld [vmem:[%s1 + $0x74] sm:$0xf]
  %v64 = vld [vmem:[%s1 + $0x78] sm:$0xf]
  %v65 = vld [vmem:[%s1 + $0x7c] sm:$0xf]
  %v66 = vld [vmem:[%s1 + $0x80] sm:$0xf]
  %v67 = vld [vmem:[%s1 + $0x84] sm:$0xf]
  %v68 = vld [vmem:[%s1 + $0x88] sm:$0xf]
  %v69 = vld [vmem:[%s1 + $0x8c] sm:$0xf]
  %v70 = vld [vmem:[%s1 + $0x90] sm:$0xf]
  %v71 = vld [vmem:[%s1 + $0x94] sm:$0xf]
  %v72 = vld [vmem:[%s1 + $0x98] sm:$0xf]
  %v73 = vld [vmem:[%s1 + $0x9c] sm:$0xf]
  %v74 = vld [vmem:[%s1 + $0xa0] sm:$0xf]
  %v75 = vld [vmem:[%s1 + $0xa4] sm:$0xf]
  %v76 = vld [vmem:[%s1 + $0xa8] sm:$0xf]
  %v77 = vld [vmem:[%s1 + $0xac] sm:$0xf]
  %v78 = vld [vmem:[%s1 + $0xb0] sm:$0xf]
  %v79 = vld [vmem:[%s1 + $0xb4] sm:$0xf]
  %v80 = vld [vmem:[%s1 + $0xb8] sm:$0xf]
  %v81 = vld [vmem:[%s1 + $0xbc] sm:$0xf]
  %v82 = vld [vmem:[%s1 + $0xc0] sm:$0xf]
  %v83 = vld [vmem:[%s1 + $0xc4] sm:$0xf]
  %v84 = vld [vmem:[%s1 + $0xc8] sm:$0xf]
  %v85 = vld [vmem:[%s1 + $0xcc] sm:$0xf]
  %v86 = vld [vmem:[%s1 + $0xd0] sm:$0xf]
  %v87 = vld [vmem:[%s1 + $0xd4] sm:$0xf]
  %v88 = vld [vmem:[%s1 + $0xd8] sm:$0xf]
  %v89 = vld [vmem:[%s1 + $0xdc] sm:$0xf]
  %v90 = vld [vmem:[%s1 + $0xe0] sm:$0xf]
  %v91 = vld [vmem:[%s1 + $0xe4] sm:$0xf]
  %v92 = vld [vmem:[%s1 + $0xe8] sm:$0xf]
  %v93 = vld [vmem:[%s1 + $0xec] sm:$0xf]
  %v94 = vld [vmem:[%s1 + $0xf0] sm:$0xf]
  %v95 = vld [vmem:[%s1 + $0xf4] sm:$0xf]
  %v96 = vld [vmem:[%s1 + $0xf8] sm:$0xf]
  %v97 = vld [vmem:[%s1 + $0xfc] sm:$0xf]
  %v98 = vld [vmem:[%s1 + $0x100] sm:$0xf]
  %v99 = vld [vmem:[%s1 + $0x104] sm:$0xf]
  %v100 = vld [vmem:[%s1 + $0x108] sm:$0xf]
  %v101 = vld [vmem:[%s1 + $0x10c] sm:$0xf]
  %v102 = vld [vmem:[%s1 + $0x110] sm:$0xf]
  %v103 = vld [vmem:[%s1 + $0x114] sm:$0xf]
  %v104 = vld [vmem:[%s1 + $0x118] sm:$0xf]
  %v105 = vld [vmem:[%s1 + $0x11c] sm:$0xf]
  %v106 = vld [vmem:[%s1 + $0x120] sm:$0xf]
  %v107 = vld [vmem:[%s1 + $0x124] sm:$0xf]
  %v108 = vld [vmem:[%s1 + $0x128] sm:$0xf]
  %v109 = vld [vmem:[%s1 + $0x12c] sm:$0xf]
  %v110 = vld [vmem:[%s1 + $0x130] sm:$0xf]
  %v111 = vld [vmem:[%s1 + $0x134] sm:$0xf]
  %v112 = vld [vmem:[%s1 + $0x138] sm:$0xf]
  %v113 = vld [vmem:[%s1 + $0x13c] sm:$0xf]
  %v114 = vld [vmem:[%s1 + $0x140] sm:$0xf]
  %v115 = vld [vmem:[%s1 + $0x144] sm:$0xf]
  %v116 = vld [vmem:[%s1 + $0x148] sm:$0xf]
  %v117 = vld [vmem:[%s1 + $0x14c] sm:$0xf]
  %v118 = vld [vmem:[%s1 + $0x150] sm:$0xf]
  %v119 = vld [vmem:[%s1 + $0x154] sm:$0xf]
  %v120 = vld [vmem:[%s1 + $0x158] sm:$0xf]
  %v121 = vld [vmem:[%s1 + $0x15c] sm:$0xf]
  %v122 = vld [vmem:[%s1 + $0x160] sm:$0xf]
  %v123 = vld [vmem:[%s1 + $0x164] sm:$0xf]
  %v124 = vld [vmem:[%s1 + $0x168] sm:$0xf]
  %v125 = vld [vmem:[%s1 + $0x16c] sm:$0xf]
  %v126 = vld [vmem:[%s1 + $0x170] sm:$0xf]
  %v127 = vld [vmem:[%s1 + $0x174] sm:$0xf]
  %v128 = vld [vmem:[%s1 + $0x178] sm:$0xf]
  %v129 = vld [vmem:[%s1 + $0x17c] sm:$0xf]
  %v130 = vld [vmem:[%s2] sm:$0x1]
  %v132 = vlaneseq
  %v133 = vshrl.u32 %v132, 7
  %v134 = vsub.s32 0, %v133
  %v135 = vrot.slane %v130, %v134
  %v143 = vunpack.c.l.b16 %v28
  %v144 = vunpack.c.h.b16 %v28
  %v145 = vunpack.c.l.b16 %v29
  %v146 = vunpack.c.h.b16 %v29
  %v147 = vunpack.c.l.b16 %v30
  %v148 = vunpack.c.h.b16 %v30
  %v149 = vunpack.c.l.b16 %v31
  %v150 = vunpack.c.h.b16 %v31
  %v151 = vunpack.c.l.b16 %v32
  %v152 = vunpack.c.h.b16 %v32
  %v153 = vunpack.c.l.b16 %v33
  %v154 = vunpack.c.h.b16 %v33
  %v155 = vpack.c.b16 %v149, %v143
  %v156 = vpack.c.b16 %v150, %v144
  %v157 = vpack.c.b16 %v151, %v145
  %v158 = vpack.c.b16 %v152, %v146
  %v159 = vpack.c.b16 %v153, %v147
  %v160 = vpack.c.b16 %v154, %v148
  %v263 = vunpack.c.l.b16 %v34
  %v264 = vunpack.c.l.b16 %v35
  %v265 = vunpack.c.l.b16 %v36
  %v266 = vunpack.c.l.b16 %v37
  %v267 = vunpack.c.l.b16 %v38
  %v268 = vunpack.c.l.b16 %v39
  %v269 = vunpack.c.l.b16 %v40
  %v270 = vunpack.c.l.b16 %v41
  %v271 = vunpack.c.l.b16 %v42
  %v272 = vunpack.c.l.b16 %v43
  %v273 = vunpack.c.l.b16 %v44
  %v274 = vunpack.c.l.b16 %v45
  %v275 = vunpack.c.l.b16 %v46
  %v276 = vunpack.c.l.b16 %v47
  %v277 = vunpack.c.l.b16 %v48
  %v278 = vunpack.c.l.b16 %v49
  %v279 = vunpack.c.l.b16 %v50
  %v280 = vunpack.c.l.b16 %v51
  %v281 = vunpack.c.l.b16 %v52
  %v282 = vunpack.c.l.b16 %v53
  %v283 = vunpack.c.l.b16 %v54
  %v284 = vunpack.c.l.b16 %v55
  %v285 = vunpack.c.l.b16 %v56
  %v286 = vunpack.c.l.b16 %v57
  %v287 = vunpack.c.l.b16 %v58
  %v288 = vunpack.c.l.b16 %v59
  %v289 = vunpack.c.l.b16 %v60
  %v290 = vunpack.c.l.b16 %v61
  %v291 = vunpack.c.l.b16 %v62
  %v292 = vunpack.c.l.b16 %v63
  %v293 = vunpack.c.l.b16 %v64
  %v294 = vunpack.c.l.b16 %v65
  %v295 = vunpack.c.l.b16 %v66
  %v296 = vunpack.c.l.b16 %v67
  %v297 = vunpack.c.l.b16 %v68
  %v298 = vunpack.c.l.b16 %v69
  %v299 = vunpack.c.l.b16 %v70
  %v300 = vunpack.c.l.b16 %v71
  %v301 = vunpack.c.l.b16 %v72
  %v302 = vunpack.c.l.b16 %v73
  %v303 = vunpack.c.l.b16 %v74
  %v304 = vunpack.c.l.b16 %v75
  %v305 = vunpack.c.l.b16 %v76
  %v306 = vunpack.c.l.b16 %v77
  %v307 = vunpack.c.l.b16 %v78
  %v308 = vunpack.c.l.b16 %v79
  %v309 = vunpack.c.l.b16 %v80
  %v310 = vunpack.c.l.b16 %v81
  %v311 = vunpack.c.l.b16 %v82
  %v312 = vunpack.c.l.b16 %v83
  %v313 = vunpack.c.l.b16 %v84
  %v314 = vunpack.c.l.b16 %v85
  %v315 = vunpack.c.l.b16 %v86
  %v316 = vunpack.c.l.b16 %v87
  %v317 = vunpack.c.l.b16 %v88
  %v318 = vunpack.c.l.b16 %v89
  %v319 = vunpack.c.l.b16 %v90
  %v320 = vunpack.c.l.b16 %v91
  %v321 = vunpack.c.l.b16 %v92
  %v322 = vunpack.c.l.b16 %v93
  %v323 = vunpack.c.l.b16 %v94
  %v324 = vunpack.c.l.b16 %v95
  %v325 = vunpack.c.l.b16 %v96
  %v326 = vunpack.c.l.b16 %v97
  %v327 = vunpack.c.l.b16 %v98
  %v328 = vunpack.c.l.b16 %v99
  %v329 = vunpack.c.l.b16 %v100
  %v330 = vunpack.c.l.b16 %v101
  %v331 = vunpack.c.l.b16 %v102
  %v332 = vunpack.c.l.b16 %v103
  %v333 = vunpack.c.l.b16 %v104
  %v334 = vunpack.c.l.b16 %v105
  %v335 = vunpack.c.l.b16 %v106
  %v336 = vunpack.c.l.b16 %v107
  %v337 = vunpack.c.l.b16 %v108
  %v338 = vunpack.c.l.b16 %v109
  %v339 = vunpack.c.l.b16 %v110
  %v340 = vunpack.c.l.b16 %v111
  %v341 = vunpack.c.l.b16 %v112
  %v342 = vunpack.c.l.b16 %v113
  %v343 = vunpack.c.l.b16 %v114
  %v344 = vunpack.c.l.b16 %v115
  %v345 = vunpack.c.l.b16 %v116
  %v346 = vunpack.c.l.b16 %v117
  %v347 = vunpack.c.l.b16 %v118
  %v348 = vunpack.c.l.b16 %v119
  %v349 = vunpack.c.l.b16 %v120
  %v350 = vunpack.c.l.b16 %v121
  %v351 = vunpack.c.l.b16 %v122
  %v352 = vunpack.c.l.b16 %v123
  %v353 = vunpack.c.l.b16 %v124
  %v354 = vunpack.c.l.b16 %v125
  %v355 = vunpack.c.l.b16 %v126
  %v356 = vunpack.c.l.b16 %v127
  %v357 = vunpack.c.l.b16 %v128
  %v358 = vunpack.c.l.b16 %v129
  %v359 = vpack.c.b16 %v264, %v263
  %v360 = vpack.c.b16 %v266, %v265
  %v361 = vpack.c.b16 %v268, %v267
  %v362 = vpack.c.b16 %v270, %v269
  %v363 = vpack.c.b16 %v272, %v271
  %v364 = vpack.c.b16 %v274, %v273
  %v365 = vpack.c.b16 %v276, %v275
  %v366 = vpack.c.b16 %v278, %v277
  %v367 = vpack.c.b16 %v280, %v279
  %v368 = vpack.c.b16 %v282, %v281
  %v369 = vpack.c.b16 %v284, %v283
  %v370 = vpack.c.b16 %v286, %v285
  %v371 = vpack.c.b16 %v288, %v287
  %v372 = vpack.c.b16 %v290, %v289
  %v373 = vpack.c.b16 %v292, %v291
  %v374 = vpack.c.b16 %v294, %v293
  %v375 = vpack.c.b16 %v296, %v295
  %v376 = vpack.c.b16 %v298, %v297
  %v377 = vpack.c.b16 %v300, %v299
  %v378 = vpack.c.b16 %v302, %v301
  %v379 = vpack.c.b16 %v304, %v303
  %v380 = vpack.c.b16 %v306, %v305
  %v381 = vpack.c.b16 %v308, %v307
  %v382 = vpack.c.b16 %v310, %v309
  %v383 = vpack.c.b16 %v312, %v311
  %v384 = vpack.c.b16 %v314, %v313
  %v385 = vpack.c.b16 %v316, %v315
  %v386 = vpack.c.b16 %v318, %v317
  %v387 = vpack.c.b16 %v320, %v319
  %v388 = vpack.c.b16 %v322, %v321
  %v389 = vpack.c.b16 %v324, %v323
  %v390 = vpack.c.b16 %v326, %v325
  %v391 = vpack.c.b16 %v328, %v327
  %v392 = vpack.c.b16 %v330, %v329
  %v393 = vpack.c.b16 %v332, %v331
  %v394 = vpack.c.b16 %v334, %v333
  %v395 = vpack.c.b16 %v336, %v335
  %v396 = vpack.c.b16 %v338, %v337
  %v397 = vpack.c.b16 %v340, %v339
  %v398 = vpack.c.b16 %v342, %v341
  %v399 = vpack.c.b16 %v344, %v343
  %v400 = vpack.c.b16 %v346, %v345
  %v401 = vpack.c.b16 %v348, %v347
  %v402 = vpack.c.b16 %v350, %v349
  %v403 = vpack.c.b16 %v352, %v351
  %v404 = vpack.c.b16 %v354, %v353
  %v405 = vpack.c.b16 %v356, %v355
  %v406 = vpack.c.b16 %v358, %v357
  %455 = vmatprep.subr.bf16.mxu0 0
  %456 = vmatpush1.bf16.msra.mxu0 %v359
  %457 = vmatprep.subr.bf16.mxu0 0
  %458 = vmatpush1.bf16.msra.mxu0 %v360
  %459 = vmatprep.subr.bf16.mxu0 0
  %460 = vmatpush1.bf16.msra.mxu0 %v361
  %461 = vmatprep.subr.bf16.mxu0 0
  %462 = vmatpush1.bf16.msra.mxu0 %v362
  %463 = vmatprep.subr.bf16.mxu0 0
  %464 = vmatpush1.bf16.msra.mxu0 %v363
  %465 = vmatprep.subr.bf16.mxu0 0
  %466 = vmatpush1.bf16.msra.mxu0 %v364
  %467 = vmatprep.subr.bf16.mxu0 0
  %468 = vmatpush1.bf16.msra.mxu0 %v365
  %469 = vmatprep.subr.bf16.mxu0 0
  %470 = vmatpush1.bf16.msra.mxu0 %v366
  %471 = vmatprep.subr.bf16.mxu0 0
  %472 = vmatpush1.bf16.msra.mxu0 %v367
  %473 = vmatprep.subr.bf16.mxu0 0
  %474 = vmatpush1.bf16.msra.mxu0 %v368
  %475 = vmatprep.subr.bf16.mxu0 0
  %476 = vmatpush1.bf16.msra.mxu0 %v369
  %477 = vmatprep.subr.bf16.mxu0 0
  %478 = vmatpush1.bf16.msra.mxu0 %v370
  %479 = vmatprep.subr.bf16.mxu0 0
  %480 = vmatpush1.bf16.msra.mxu0 %v371
  %481 = vmatprep.subr.bf16.mxu0 0
  %482 = vmatpush1.bf16.msra.mxu0 %v372
  %483 = vmatprep.subr.bf16.mxu0 0
  %484 = vmatpush1.bf16.msra.mxu0 %v373
  %485 = vmatprep.subr.bf16.mxu0 0
  %486 = vmatpush1.bf16.msra.mxu0 %v374
  %487 = vmatprep.mubr.bf16.mxu0 %v156
  %488 = vmatmul.mubr.bf16.gmra.mrb[0].mxu0 %v155
  %v489 = vpop.f32.mrb[0].mxu0
  %v490 = vadd.f32 %v135, %v489
  %v491 = vpop.f32.mrb[0].mxu0
  %v492 = vpop.f32.mrb[0].mxu0
  %v493 = vadd.f32 %v135, %v492
  %v494 = vpop.f32.mrb[0].mxu0
  %495 = vdwg.mxu0
  %496 = vmatprep.subr.bf16.mxu0 0
  %497 = vmatpush1.bf16.msra.mxu0 %v375
  %498 = vmatprep.subr.bf16.mxu0 0
  %499 = vmatpush1.bf16.msra.mxu0 %v376
  %500 = vmatprep.subr.bf16.mxu0 0
  %501 = vmatpush1.bf16.msra.mxu0 %v377
  %502 = vmatprep.subr.bf16.mxu0 0
  %503 = vmatpush1.bf16.msra.mxu0 %v378
  %504 = vmatprep.subr.bf16.mxu0 0
  %505 = vmatpush1.bf16.msra.mxu0 %v379
  %506 = vmatprep.subr.bf16.mxu0 0
  %507 = vmatpush1.bf16.msra.mxu0 %v380
  %508 = vmatprep.subr.bf16.mxu0 0
  %509 = vmatpush1.bf16.msra.mxu0 %v381
  %510 = vmatprep.subr.bf16.mxu0 0
  %511 = vmatpush1.bf16.msra.mxu0 %v382
  %512 = vmatprep.subr.bf16.mxu0 0
  %513 = vmatpush1.bf16.msra.mxu0 %v383
  %514 = vmatprep.subr.bf16.mxu0 0
  %515 = vmatpush1.bf16.msra.mxu0 %v384
  %516 = vmatprep.subr.bf16.mxu0 0
  %517 = vmatpush1.bf16.msra.mxu0 %v385
  %518 = vmatprep.subr.bf16.mxu0 0
  %519 = vmatpush1.bf16.msra.mxu0 %v386
  %520 = vmatprep.subr.bf16.mxu0 0
  %521 = vmatpush1.bf16.msra.mxu0 %v387
  %522 = vmatprep.subr.bf16.mxu0 0
  %523 = vmatpush1.bf16.msra.mxu0 %v388
  %524 = vmatprep.subr.bf16.mxu0 0
  %525 = vmatpush1.bf16.msra.mxu0 %v389
  %526 = vmatprep.subr.bf16.mxu0 0
  %527 = vmatpush1.bf16.msra.mxu0 %v390
  %528 = vmatprep.mubr.bf16.mxu0 %v158
  %529 = vmatmul.mubr.bf16.gmra.mrb[0].mxu0 %v157
  %v530 = vpop.f32.mrb[0].mxu0
  %v531 = vadd.f32 %v490, %v530
  %v532 = vpop.f32.mrb[0].mxu0
  %v533 = vpop.f32.mrb[0].mxu0
  %v534 = vadd.f32 %v493, %v533
  %v535 = vpop.f32.mrb[0].mxu0
  %536 = vdwg.mxu0
  %537 = vmatprep.subr.bf16.mxu0 0
  %538 = vmatpush1.bf16.msra.mxu0 %v391
  %539 = vmatprep.subr.bf16.mxu0 0
  %540 = vmatpush1.bf16.msra.mxu0 %v392
  %541 = vmatprep.subr.bf16.mxu0 0
  %542 = vmatpush1.bf16.msra.mxu0 %v393
  %543 = vmatprep.subr.bf16.mxu0 0
  %544 = vmatpush1.bf16.msra.mxu0 %v394
  %545 = vmatprep.subr.bf16.mxu0 0
  %546 = vmatpush1.bf16.msra.mxu0 %v395
  %547 = vmatprep.subr.bf16.mxu0 0
  %548 = vmatpush1.bf16.msra.mxu0 %v396
  %549 = vmatprep.subr.bf16.mxu0 0
  %550 = vmatpush1.bf16.msra.mxu0 %v397
  %551 = vmatprep.subr.bf16.mxu0 0
  %552 = vmatpush1.bf16.msra.mxu0 %v398
  %553 = vmatprep.subr.bf16.mxu0 0
  %554 = vmatpush1.bf16.msra.mxu0 %v399
  %555 = vmatprep.subr.bf16.mxu0 0
  %556 = vmatpush1.bf16.msra.mxu0 %v400
  %557 = vmatprep.subr.bf16.mxu0 0
  %558 = vmatpush1.bf16.msra.mxu0 %v401
  %559 = vmatprep.subr.bf16.mxu0 0
  %560 = vmatpush1.bf16.msra.mxu0 %v402
  %561 = vmatprep.subr.bf16.mxu0 0
  %562 = vmatpush1.bf16.msra.mxu0 %v403
  %563 = vmatprep.subr.bf16.mxu0 0
  %564 = vmatpush1.bf16.msra.mxu0 %v404
  %565 = vmatprep.subr.bf16.mxu0 0
  %566 = vmatpush1.bf16.msra.mxu0 %v405
  %567 = vmatprep.subr.bf16.mxu0 0
  %568 = vmatpush1.bf16.msra.mxu0 %v406
  %569 = vmatprep.mubr.bf16.mxu0 %v160
  %570 = vmatmul.mubr.bf16.gmra.mrb[0].mxu0 %v159
  %v571 = vpop.f32.mrb[0].mxu0
  %v572 = vadd.f32 %v531, %v571
  %v573 = vpop.f32.mrb[0].mxu0
  %v574 = vpop.f32.mrb[0].mxu0
  %v575 = vadd.f32 %v534, %v574
  %v576 = vpop.f32.mrb[0].mxu0
  %577 = vdwg.mxu0
  %v578 = vmul.f32 %v572, %v572
  %v579 = vmul.f32 %v575, %v575
  %580 = vadd.xlane.f32.xlu0 %v578
  %v581 = vpop.xlane.xlu0 %580
  %582 = vadd.xlane.f32.xlu0 %v579
  %v583 = vpop.xlane.xlu0 %582
  %v584 = vrsqrt.pop %v581
  %v585 = vrsqrt.pop %v583
  %v586 = vmul.f32 %v572, %v584
  %v587 = vmul.f32 %v575, %v585
  %v588 = vpack.c.bf16 %v587, %v586
  %v589 = vld [vmem:[%s3] sm:$0xf]
  %v590 = vld [vmem:[%s3 + $0x4] sm:$0xf]
  %v591 = vld [vmem:[%s3 + $0x8] sm:$0xf]
  %v592 = vld [vmem:[%s3 + $0xc] sm:$0xf]
  %v593 = vld [vmem:[%s3 + $0x10] sm:$0xf]
  %v594 = vld [vmem:[%s3 + $0x14] sm:$0xf]
  %v595 = vld [vmem:[%s3 + $0x18] sm:$0xf]
  %v596 = vld [vmem:[%s3 + $0x1c] sm:$0xf]
  %v597 = vld [vmem:[%s3 + $0x20] sm:$0xf]
  %v598 = vld [vmem:[%s3 + $0x24] sm:$0xf]
  %v599 = vld [vmem:[%s3 + $0x28] sm:$0xf]
  %v600 = vld [vmem:[%s3 + $0x2c] sm:$0xf]
  %v601 = vld [vmem:[%s3 + $0x30] sm:$0xf]
  %v602 = vld [vmem:[%s3 + $0x34] sm:$0xf]
  %v603 = vld [vmem:[%s3 + $0x38] sm:$0xf]
  %v604 = vld [vmem:[%s3 + $0x3c] sm:$0xf]
  %v605 = vld [vmem:[%s4] sm:$0x1]
  %v607 = vlaneseq
  %v608 = vshrl.u32 %v607, 7
  %v609 = vsub.s32 0, %v608
  %v610 = vrot.slane %v605, %v609
  %v628 = vunpack.c.l.b16 %v589
  %v629 = vunpack.c.l.b16 %v590
  %v630 = vunpack.c.l.b16 %v591
  %v631 = vunpack.c.l.b16 %v592
  %v632 = vunpack.c.l.b16 %v593
  %v633 = vunpack.c.l.b16 %v594
  %v634 = vunpack.c.l.b16 %v595
  %v635 = vunpack.c.l.b16 %v596
  %v636 = vunpack.c.l.b16 %v597
  %v637 = vunpack.c.l.b16 %v598
  %v638 = vunpack.c.l.b16 %v599
  %v639 = vunpack.c.l.b16 %v600
  %v640 = vunpack.c.l.b16 %v601
  %v641 = vunpack.c.l.b16 %v602
  %v642 = vunpack.c.l.b16 %v603
  %v643 = vunpack.c.l.b16 %v604
  %v644 = vpack.c.b16 %v629, %v628
  %v645 = vpack.c.b16 %v631, %v630
  %v646 = vpack.c.b16 %v633, %v632
  %v647 = vpack.c.b16 %v635, %v634
  %v648 = vpack.c.b16 %v637, %v636
  %v649 = vpack.c.b16 %v639, %v638
  %v650 = vpack.c.b16 %v641, %v640
  %v651 = vpack.c.b16 %v643, %v642
  %660 = vmatprep.subr.bf16.mxu0 0
  %661 = vmatpush1.bf16.msra.mxu0 %v644
  %662 = vmatprep.subr.bf16.mxu0 0
  %663 = vmatpush1.bf16.msra.mxu0 %v645
  %664 = vmatprep.subr.bf16.mxu0 0
  %665 = vmatpush1.bf16.msra.mxu0 %v646
  %666 = vmatprep.subr.bf16.mxu0 0
  %667 = vmatpush1.bf16.msra.mxu0 %v647
  %668 = vmatprep.subr.bf16.mxu0 0
  %669 = vmatpush1.bf16.msra.mxu0 %v648
  %670 = vmatprep.subr.bf16.mxu0 0
  %671 = vmatpush1.bf16.msra.mxu0 %v649
  %672 = vmatprep.subr.bf16.mxu0 0
  %673 = vmatpush1.bf16.msra.mxu0 %v650
  %674 = vmatprep.subr.bf16.mxu0 0
  %675 = vmatpush1.bf16.msra.mxu0 %v651
  %676 = vmatprep.subr.bf16.mxu0 0
  %677 = vmatpush1.bf16.msra.mxu0 0
  %678 = vmatprep.subr.bf16.mxu0 0
  %679 = vmatpush1.bf16.msra.mxu0 0
  %680 = vmatprep.subr.bf16.mxu0 0
  %681 = vmatpush1.bf16.msra.mxu0 0
  %682 = vmatprep.subr.bf16.mxu0 0
  %683 = vmatpush1.bf16.msra.mxu0 0
  %684 = vmatprep.subr.bf16.mxu0 0
  %685 = vmatpush1.bf16.msra.mxu0 0
  %686 = vmatprep.subr.bf16.mxu0 0
  %687 = vmatpush1.bf16.msra.mxu0 0
  %688 = vmatprep.subr.bf16.mxu0 0
  %689 = vmatpush1.bf16.msra.mxu0 0
  %690 = vmatprep.subr.bf16.mxu0 0
  %691 = vmatpush1.bf16.msra.mxu0 0
  %692 = vmatprep.mubr.bf16.mxu0 0
  %693 = vmatmul.mubr.bf16.gmra.mrb[0].mxu0 %v588
  %v694 = vpop.f32.mrb[0].mxu0
  %v695 = vadd.f32 %v610, %v694
  %v696 = vpop.f32.mrb[0].mxu0
  %v697 = vpop.f32.mrb[0].mxu0
  %v698 = vadd.f32 %v610, %v697
  %v699 = vpop.f32.mrb[0].mxu0
  %700 = vdwg.mxu0
  %v701 = vmax.f32 %v695, 0.0
  %v702 = vmax.f32 %v698, 0.0
  %v703 = vld [vmem:[%s5] sm:$0x1]
  %v705 = vlaneseq
  %v706 = vshrl.u32 %v705, 7
  %v707 = vsub.s32 0, %v706
  %v708 = vrot.slane %v703, %v707
  %v710 = vmul.f32 %v701, %v708
  %v711 = vmul.f32 %v702, %v708
  %712 = vadd.xlane.f32.xlu0 %v710
  %v713 = vpop.xlane.xlu0 %712
  %714 = vadd.xlane.f32.xlu0 %v711
  %v715 = vpop.xlane.xlu0 %714
  %s716 = sld [smem:[#allocation2]]
  %v717 = vstv %s716
  %v718 = vadd.f32 %v713, %v717
  %v719 = vadd.f32 %v715, %v717
  %720 = vst [vmem:[%s7] sm:$0xff] %v718
  %721 = vst [vmem:[%s7 + $0x8] sm:$0xff] %v719
  // Predicated region
  $region30: #{combined_model.1} parent=0 // pred_check
    _
  $region31: #{combined_model.1} parent=0 // pred_check_branch
    %723 = sbr.rel (0) target = $region33
  $region32: #{combined_model.1} parent=0 // pred_region
    _
  $region33: #{combined_model.1} parent=0 // pred_fallthru
    _
  // Predicated region
  $region34: #{combined_model.1} parent=0 // pred_check
    _
  $region35: #{combined_model.1} parent=0 // pred_check_branch
    %725 = sbr.rel (0) target = $region37
  $region36: #{combined_model.1} parent=0 // pred_region
    _
  $region37: #{combined_model.1} parent=0 // pred_fallthru
    _

</llo_original>
